<compile_context>
chip_gen: v6e
topology: v6e:2x2x1
jax: 0.10.0
libtpu: 0.0.40
codegen_flags: <defaults>
</compile_context>

<pallas_src>
import functools

import jax
import jax.numpy as jnp
from jax.experimental import pallas as pl
from jax.experimental.pallas import tpu as pltpu


def layer1_kernel(w_ref, x_ref, o_ref, *, K, T, D, T1):
    # w_ref: SMEM (D, K) f32 conv filter taps (read as scalars)
    # x_ref: VMEM (T, TM) f32 — time on sublanes, M-rows on lanes (lane-dense)
    # o_ref: VMEM (D, T1, TM) f32 — softmax(conv -> relu -> maxpool) over T1
    pad = K // 2
    x = x_ref[...]                                   # (T, TM)
    TM = x.shape[-1]
    T_out = T + 2 * pad - K + 1

    # Zero-pad the time (sublane) axis in VMEM — no wrapper HBM pad pass.
    if pad > 0:
        zrow = jnp.zeros((pad, TM), jnp.float32)
        xp = jnp.concatenate([zrow, x, zrow], axis=0)    # (T + 2*pad, TM)
    else:
        xp = x

    chans = []
    for dch in range(D):
        # conv1d (cross-correlation), taps unrolled:
        #   scalar weight from SMEM * shifted (T_out, TM) slab  -> VPU FMAs.
        y = w_ref[dch, 0] * xp[0:T_out, :]
        for k in range(1, K):
            y = y + w_ref[dch, k] * xp[k:k + T_out, :]
        y = jnp.maximum(y, 0.0)                          # ReLU

        # max_pool1d(kernel=K, stride=K): unrolled jnp.maximum of shifted
        # rows (pure VPU, no XLU reduce). Trailing T_out % K samples are
        # dropped — matches torch max_pool1d floor mode.
        rows = []
        for t1 in range(T1):
            r = y[t1 * K:t1 * K + 1, :]
            for j in range(1, K):
                r = jnp.maximum(r, y[t1 * K + j:t1 * K + j + 1, :])
            rows.append(r)
        chans.append(jnp.concatenate(rows, axis=0))      # (T1, TM)

    z = jnp.stack(chans, axis=0)                         # (D, T1, TM)

    # Softmax over T1 (dim=1 of the final (B, T1, N, d, D) tensor):
    # unrolled max/add over the tiny T1 axis, exp on the EUP, approximate
    # reciprocal (EUP) + one Newton step instead of a vector divide.
    m = z[:, 0:1, :]
    for t1 in range(1, T1):
        m = jnp.maximum(m, z[:, t1:t1 + 1, :])
    e = jnp.exp(z - m)
    s = e[:, 0:1, :]
    for t1 in range(1, T1):
        s = s + e[:, t1:t1 + 1, :]
    inv = pl.reciprocal(s, approx=True)
    inv = inv * (2.0 - s * inv)                          # 1 NR step -> ~f32 exact
    o_ref[...] = e * inv


def layer1_forward(x, kernel, *, kernel_size, tm_max=512):
    """x: (B, T, N, d) f32; kernel: (D, 1, K) f32. Returns (B, T1, N, d, D)."""
    B, T, N, d = x.shape
    D = kernel.shape[0]
    K = kernel_size
    pad = K // 2
    T_out = T + 2 * pad - K + 1
    T1 = T_out // K
    M = B * N * d
    LANE = 128

    # Layout glue: put time on sublanes, rows (B*N*d) on lanes.
    # (B, T, N, d) -> (T, B, N, d) -> (T, M); column m = b*N*d + n*d + dd.
    xt = jnp.transpose(x, (1, 0, 2, 3)).reshape(T, M).astype(jnp.float32)
    w2d = kernel.reshape(D, K).astype(jnp.float32)

    # Lane-tile selection: biggest 128-multiple up to tm_max (tm_max=512 keeps
    # the double-buffered block well under even v7x's 32 MiB scoped VMEM);
    # keep >= 2 grid steps when there is enough work (v7x has 2 TensorCores).
    m128 = ((M + LANE - 1) // LANE) * LANE
    TM = min(tm_max, m128)
    if m128 // TM < 2 and m128 >= 2 * LANE:
        TM = max(LANE, ((m128 // 2) // LANE) * LANE)
    M_pad = ((M + TM - 1) // TM) * TM
    if M_pad != M:
        # Padded lane columns are all-zero; they produce harmless 1/T1 softmax
        # values and are cropped below.
        xt = jnp.pad(xt, ((0, 0), (0, M_pad - M)))

    grid = (M_pad // TM,)
    out = pl.pallas_call(
        functools.partial(layer1_kernel, K=K, T=T, D=D, T1=T1),
        out_shape=jax.ShapeDtypeStruct((D, T1, M_pad), jnp.float32),
        grid_spec=pltpu.PrefetchScalarGridSpec(
            num_scalar_prefetch=0,
            grid=grid,
            in_specs=[
                # tiny (D, K) filter table -> SMEM, read as scalars in-kernel
                pl.BlockSpec(memory_space=pltpu.MemorySpace.SMEM),
                # lane-dense input block: full time extent, TM lanes per step
                pl.BlockSpec((T, TM), lambda i: (0, i)),
            ],
            out_specs=pl.BlockSpec((D, T1, TM), lambda i: (0, 0, i)),
        ),
        compiler_params=pltpu.CompilerParams(
            dimension_semantics=("parallel",)),
    )(w2d, xt)

    # Layout glue back to the PyTorch output layout (B, T1, N, d, D).
    z = out[:, :, :M].reshape(D, T1, B, N, d)
    return jnp.transpose(z, (2, 1, 3, 4, 0))


def layer1_reference(x, kernel, kernel_size):
    """Pure-JAX reference mirroring the torch forward."""
    B, T, N, d = x.shape
    D = kernel.shape[0]
    K = kernel_size
    pad = K // 2
    x_rows = jnp.transpose(x, (0, 2, 3, 1)).reshape(-1, T)
    xp = jnp.pad(x_rows, ((0, 0), (pad, pad)))
    T_out = T + 2 * pad - K + 1
    y = jnp.zeros((x_rows.shape[0], D, T_out), jnp.float32)
    for k in range(K):
        y = y + xp[:, None, k:k + T_out] * kernel[None, :, 0, k:k + 1]
    y = jnp.maximum(y, 0.0)
    T1 = T_out // K
    y = y[:, :, :T1 * K].reshape(-1, D, T1, K).max(-1)
    z = jnp.transpose(y.reshape(B, N, d, D, T1), (0, 4, 1, 2, 3))
    return jax.nn.softmax(z, axis=1)


if __name__ == "__main__":
    key = jax.random.PRNGKey(0)
    B, T, N, d = 2, 16, 3, 4     # batch, time, joints, feature dim
    D, K = 8, 3                  # conv output channels, kernel size
    k1, k2 = jax.random.split(key)
    x = jax.random.normal(k1, (B, T, N, d), dtype=jnp.float32)
    conv_kernel = jax.random.normal(k2, (D, 1, K), dtype=jnp.float32) * 0.1

    w = layer1_forward(x, conv_kernel, kernel_size=K)
    w = jax.block_until_ready(w)

    T1 = (T + 2 * (K // 2) - K + 1) // K
    assert w.shape == (B, T1, N, d, D), w.shape
    ref = layer1_reference(x, conv_kernel, K)
    assert jnp.allclose(w, ref, atol=1e-5, rtol=1e-5), float(
        jnp.max(jnp.abs(w - ref)))

    print("KERNEL_OK")
</pallas_src>

<mosaic_0001>
module attributes {stable_mosaic.version = 11 : i64} {
  func.func @layer1_kernel(%arg0: i32, %arg1: memref<8x3xf32, #tpu.memory_space<smem>>, %arg2: memref<16x128xf32, #tpu.memory_space<vmem>>, %arg3: memref<8x5x128xf32, #tpu.memory_space<vmem>>) attributes {dimension_semantics = [#tpu.dimension_semantics<parallel>], iteration_bounds = array<i64: 1>, scalar_prefetch = 0 : i64, scratch_operands = 0 : i64, tpu.core_type = #tpu.core_type<tc>, window_params = [{transform_indices = @transform_0, window_bounds = array<i64: 8, 3>}, {transform_indices = @transform_1, window_bounds = array<i64: 16, 128>}, {transform_indices = @transform_2, window_bounds = array<i64: 8, 5, 128>}]} {
    %c0 = arith.constant 0 : index
    %c0_0 = arith.constant 0 : index
    %0 = vector.load %arg2[%c0, %c0_0] : memref<16x128xf32, #tpu.memory_space<vmem>>, vector<16x128xf32>
    %cst = arith.constant 0.000000e+00 : f32
    %1 = vector.broadcast %cst : f32 to vector<1x128xf32>
    %2 = tpu.concatenate %1, %0, %1 in 0 : vector<1x128xf32>, vector<16x128xf32>, vector<1x128xf32> -> vector<18x128xf32>
    %c0_1 = arith.constant 0 : index
    %c0_2 = arith.constant 0 : index
    %3 = memref.load %arg1[%c0_1, %c0_2] : memref<8x3xf32, #tpu.memory_space<smem>>
    %4 = vector.extract_strided_slice %2 {offsets = [0, 0], sizes = [16, 128], strides = [1, 1]} : vector<18x128xf32> to vector<16x128xf32>
    %5 = vector.broadcast %3 : f32 to vector<16x128xf32>
    %6 = arith.mulf %5, %4 : vector<16x128xf32>
    %c0_3 = arith.constant 0 : index
    %c1 = arith.constant 1 : index
    %7 = memref.load %arg1[%c0_3, %c1] : memref<8x3xf32, #tpu.memory_space<smem>>
    %8 = vector.extract_strided_slice %2 {offsets = [1, 0], sizes = [16, 128], strides = [1, 1]} : vector<18x128xf32> to vector<16x128xf32>
    %9 = vector.broadcast %7 : f32 to vector<16x128xf32>
    %10 = arith.mulf %9, %8 : vector<16x128xf32>
    %11 = arith.addf %6, %10 : vector<16x128xf32>
    %c0_4 = arith.constant 0 : index
    %c2 = arith.constant 2 : index
    %12 = memref.load %arg1[%c0_4, %c2] : memref<8x3xf32, #tpu.memory_space<smem>>
    %13 = vector.extract_strided_slice %2 {offsets = [2, 0], sizes = [16, 128], strides = [1, 1]} : vector<18x128xf32> to vector<16x128xf32>
    %14 = vector.broadcast %12 : f32 to vector<16x128xf32>
    %15 = arith.mulf %14, %13 : vector<16x128xf32>
    %16 = arith.addf %11, %15 : vector<16x128xf32>
    %cst_5 = arith.constant 0.000000e+00 : f32
    %17 = vector.broadcast %cst_5 : f32 to vector<16x128xf32>
    %18 = arith.maximumf %16, %17 : vector<16x128xf32>
    %19 = vector.extract_strided_slice %18 {offsets = [0, 0], sizes = [1, 128], strides = [1, 1]} : vector<16x128xf32> to vector<1x128xf32>
    %20 = vector.extract_strided_slice %18 {offsets = [1, 0], sizes = [1, 128], strides = [1, 1]} : vector<16x128xf32> to vector<1x128xf32>
    %21 = arith.maximumf %19, %20 : vector<1x128xf32>
    %22 = vector.extract_strided_slice %18 {offsets = [2, 0], sizes = [1, 128], strides = [1, 1]} : vector<16x128xf32> to vector<1x128xf32>
    %23 = arith.maximumf %21, %22 : vector<1x128xf32>
    %24 = vector.extract_strided_slice %18 {offsets = [3, 0], sizes = [1, 128], strides = [1, 1]} : vector<16x128xf32> to vector<1x128xf32>
    %25 = vector.extract_strided_slice %18 {offsets = [4, 0], sizes = [1, 128], strides = [1, 1]} : vector<16x128xf32> to vector<1x128xf32>
    %26 = arith.maximumf %24, %25 : vector<1x128xf32>
    %27 = vector.extract_strided_slice %18 {offsets = [5, 0], sizes = [1, 128], strides = [1, 1]} : vector<16x128xf32> to vector<1x128xf32>
    %28 = arith.maximumf %26, %27 : vector<1x128xf32>
    %29 = vector.extract_strided_slice %18 {offsets = [6, 0], sizes = [1, 128], strides = [1, 1]} : vector<16x128xf32> to vector<1x128xf32>
    %30 = vector.extract_strided_slice %18 {offsets = [7, 0], sizes = [1, 128], strides = [1, 1]} : vector<16x128xf32> to vector<1x128xf32>
    %31 = arith.maximumf %29, %30 : vector<1x128xf32>
    %32 = vector.extract_strided_slice %18 {offsets = [8, 0], sizes = [1, 128], strides = [1, 1]} : vector<16x128xf32> to vector<1x128xf32>
    %33 = arith.maximumf %31, %32 : vector<1x128xf32>
    %34 = vector.extract_strided_slice %18 {offsets = [9, 0], sizes = [1, 128], strides = [1, 1]} : vector<16x128xf32> to vector<1x128xf32>
    %35 = vector.extract_strided_slice %18 {offsets = [10, 0], sizes = [1, 128], strides = [1, 1]} : vector<16x128xf32> to vector<1x128xf32>
    %36 = arith.maximumf %34, %35 : vector<1x128xf32>
    %37 = vector.extract_strided_slice %18 {offsets = [11, 0], sizes = [1, 128], strides = [1, 1]} : vector<16x128xf32> to vector<1x128xf32>
    %38 = arith.maximumf %36, %37 : vector<1x128xf32>
    %39 = vector.extract_strided_slice %18 {offsets = [12, 0], sizes = [1, 128], strides = [1, 1]} : vector<16x128xf32> to vector<1x128xf32>
    %40 = vector.extract_strided_slice %18 {offsets = [13, 0], sizes = [1, 128], strides = [1, 1]} : vector<16x128xf32> to vector<1x128xf32>
    %41 = arith.maximumf %39, %40 : vector<1x128xf32>
    %42 = vector.extract_strided_slice %18 {offsets = [14, 0], sizes = [1, 128], strides = [1, 1]} : vector<16x128xf32> to vector<1x128xf32>
    %43 = arith.maximumf %41, %42 : vector<1x128xf32>
    %44 = tpu.concatenate %23, %28, %33, %38, %43 in 0 : vector<1x128xf32>, vector<1x128xf32>, vector<1x128xf32>, vector<1x128xf32>, vector<1x128xf32> -> vector<5x128xf32>
    %c1_6 = arith.constant 1 : index
    %c0_7 = arith.constant 0 : index
    %45 = memref.load %arg1[%c1_6, %c0_7] : memref<8x3xf32, #tpu.memory_space<smem>>
    %46 = vector.extract_strided_slice %2 {offsets = [0, 0], sizes = [16, 128], strides = [1, 1]} : vector<18x128xf32> to vector<16x128xf32>
    %47 = vector.broadcast %45 : f32 to vector<16x128xf32>
    %48 = arith.mulf %47, %46 : vector<16x128xf32>
    %c1_8 = arith.constant 1 : index
    %c1_9 = arith.constant 1 : index
    %49 = memref.load %arg1[%c1_8, %c1_9] : memref<8x3xf32, #tpu.memory_space<smem>>
    %50 = vector.extract_strided_slice %2 {offsets = [1, 0], sizes = [16, 128], strides = [1, 1]} : vector<18x128xf32> to vector<16x128xf32>
    %51 = vector.broadcast %49 : f32 to vector<16x128xf32>
    %52 = arith.mulf %51, %50 : vector<16x128xf32>
    %53 = arith.addf %48, %52 : vector<16x128xf32>
    %c1_10 = arith.constant 1 : index
    %c2_11 = arith.constant 2 : index
    %54 = memref.load %arg1[%c1_10, %c2_11] : memref<8x3xf32, #tpu.memory_space<smem>>
    %55 = vector.extract_strided_slice %2 {offsets = [2, 0], sizes = [16, 128], strides = [1, 1]} : vector<18x128xf32> to vector<16x128xf32>
    %56 = vector.broadcast %54 : f32 to vector<16x128xf32>
    %57 = arith.mulf %56, %55 : vector<16x128xf32>
    %58 = arith.addf %53, %57 : vector<16x128xf32>
    %cst_12 = arith.constant 0.000000e+00 : f32
    %59 = vector.broadcast %cst_12 : f32 to vector<16x128xf32>
    %60 = arith.maximumf %58, %59 : vector<16x128xf32>
    %61 = vector.extract_strided_slice %60 {offsets = [0, 0], sizes = [1, 128], strides = [1, 1]} : vector<16x128xf32> to vector<1x128xf32>
    %62 = vector.extract_strided_slice %60 {offsets = [1, 0], sizes = [1, 128], strides = [1, 1]} : vector<16x128xf32> to vector<1x128xf32>
    %63 = arith.maximumf %61, %62 : vector<1x128xf32>
    %64 = vector.extract_strided_slice %60 {offsets = [2, 0], sizes = [1, 128], strides = [1, 1]} : vector<16x128xf32> to vector<1x128xf32>
    %65 = arith.maximumf %63, %64 : vector<1x128xf32>
    %66 = vector.extract_strided_slice %60 {offsets = [3, 0], sizes = [1, 128], strides = [1, 1]} : vector<16x128xf32> to vector<1x128xf32>
    %67 = vector.extract_strided_slice %60 {offsets = [4, 0], sizes = [1, 128], strides = [1, 1]} : vector<16x128xf32> to vector<1x128xf32>
    %68 = arith.maximumf %66, %67 : vector<1x128xf32>
    %69 = vector.extract_strided_slice %60 {offsets = [5, 0], sizes = [1, 128], strides = [1, 1]} : vector<16x128xf32> to vector<1x128xf32>
    %70 = arith.maximumf %68, %69 : vector<1x128xf32>
    %71 = vector.extract_strided_slice %60 {offsets = [6, 0], sizes = [1, 128], strides = [1, 1]} : vector<16x128xf32> to vector<1x128xf32>
    %72 = vector.extract_strided_slice %60 {offsets = [7, 0], sizes = [1, 128], strides = [1, 1]} : vector<16x128xf32> to vector<1x128xf32>
    %73 = arith.maximumf %71, %72 : vector<1x128xf32>
    %74 = vector.extract_strided_slice %60 {offsets = [8, 0], sizes = [1, 128], strides = [1, 1]} : vector<16x128xf32> to vector<1x128xf32>
    %75 = arith.maximumf %73, %74 : vector<1x128xf32>
    %76 = vector.extract_strided_slice %60 {offsets = [9, 0], sizes = [1, 128], strides = [1, 1]} : vector<16x128xf32> to vector<1x128xf32>
    %77 = vector.extract_strided_slice %60 {offsets = [10, 0], sizes = [1, 128], strides = [1, 1]} : vector<16x128xf32> to vector<1x128xf32>
    %78 = arith.maximumf %76, %77 : vector<1x128xf32>
    %79 = vector.extract_strided_slice %60 {offsets = [11, 0], sizes = [1, 128], strides = [1, 1]} : vector<16x128xf32> to vector<1x128xf32>
    %80 = arith.maximumf %78, %79 : vector<1x128xf32>
    %81 = vector.extract_strided_slice %60 {offsets = [12, 0], sizes = [1, 128], strides = [1, 1]} : vector<16x128xf32> to vector<1x128xf32>
    %82 = vector.extract_strided_slice %60 {offsets = [13, 0], sizes = [1, 128], strides = [1, 1]} : vector<16x128xf32> to vector<1x128xf32>
    %83 = arith.maximumf %81, %82 : vector<1x128xf32>
    %84 = vector.extract_strided_slice %60 {offsets = [14, 0], sizes = [1, 128], strides = [1, 1]} : vector<16x128xf32> to vector<1x128xf32>
    %85 = arith.maximumf %83, %84 : vector<1x128xf32>
    %86 = tpu.concatenate %65, %70, %75, %80, %85 in 0 : vector<1x128xf32>, vector<1x128xf32>, vector<1x128xf32>, vector<1x128xf32>, vector<1x128xf32> -> vector<5x128xf32>
    %c2_13 = arith.constant 2 : index
    %c0_14 = arith.constant 0 : index
    %87 = memref.load %arg1[%c2_13, %c0_14] : memref<8x3xf32, #tpu.memory_space<smem>>
    %88 = vector.extract_strided_slice %2 {offsets = [0, 0], sizes = [16, 128], strides = [1, 1]} : vector<18x128xf32> to vector<16x128xf32>
    %89 = vector.broadcast %87 : f32 to vector<16x128xf32>
    %90 = arith.mulf %89, %88 : vector<16x128xf32>
    %c2_15 = arith.constant 2 : index
    %c1_16 = arith.constant 1 : index
    %91 = memref.load %arg1[%c2_15, %c1_16] : memref<8x3xf32, #tpu.memory_space<smem>>
    %92 = vector.extract_strided_slice %2 {offsets = [1, 0], sizes = [16, 128], strides = [1, 1]} : vector<18x128xf32> to vector<16x128xf32>
    %93 = vector.broadcast %91 : f32 to vector<16x128xf32>
    %94 = arith.mulf %93, %92 : vector<16x128xf32>
    %95 = arith.addf %90, %94 : vector<16x128xf32>
    %c2_17 = arith.constant 2 : index
    %c2_18 = arith.constant 2 : index
    %96 = memref.load %arg1[%c2_17, %c2_18] : memref<8x3xf32, #tpu.memory_space<smem>>
    %97 = vector.extract_strided_slice %2 {offsets = [2, 0], sizes = [16, 128], strides = [1, 1]} : vector<18x128xf32> to vector<16x128xf32>
    %98 = vector.broadcast %96 : f32 to vector<16x128xf32>
    %99 = arith.mulf %98, %97 : vector<16x128xf32>
    %100 = arith.addf %95, %99 : vector<16x128xf32>
    %cst_19 = arith.constant 0.000000e+00 : f32
    %101 = vector.broadcast %cst_19 : f32 to vector<16x128xf32>
    %102 = arith.maximumf %100, %101 : vector<16x128xf32>
    %103 = vector.extract_strided_slice %102 {offsets = [0, 0], sizes = [1, 128], strides = [1, 1]} : vector<16x128xf32> to vector<1x128xf32>
    %104 = vector.extract_strided_slice %102 {offsets = [1, 0], sizes = [1, 128], strides = [1, 1]} : vector<16x128xf32> to vector<1x128xf32>
    %105 = arith.maximumf %103, %104 : vector<1x128xf32>
    %106 = vector.extract_strided_slice %102 {offsets = [2, 0], sizes = [1, 128], strides = [1, 1]} : vector<16x128xf32> to vector<1x128xf32>
    %107 = arith.maximumf %105, %106 : vector<1x128xf32>
    %108 = vector.extract_strided_slice %102 {offsets = [3, 0], sizes = [1, 128], strides = [1, 1]} : vector<16x128xf32> to vector<1x128xf32>
    %109 = vector.extract_strided_slice %102 {offsets = [4, 0], sizes = [1, 128], strides = [1, 1]} : vector<16x128xf32> to vector<1x128xf32>
    %110 = arith.maximumf %108, %109 : vector<1x128xf32>
    %111 = vector.extract_strided_slice %102 {offsets = [5, 0], sizes = [1, 128], strides = [1, 1]} : vector<16x128xf32> to vector<1x128xf32>
    %112 = arith.maximumf %110, %111 : vector<1x128xf32>
    %113 = vector.extract_strided_slice %102 {offsets = [6, 0], sizes = [1, 128], strides = [1, 1]} : vector<16x128xf32> to vector<1x128xf32>
    %114 = vector.extract_strided_slice %102 {offsets = [7, 0], sizes = [1, 128], strides = [1, 1]} : vector<16x128xf32> to vector<1x128xf32>
    %115 = arith.maximumf %113, %114 : vector<1x128xf32>
    %116 = vector.extract_strided_slice %102 {offsets = [8, 0], sizes = [1, 128], strides = [1, 1]} : vector<16x128xf32> to vector<1x128xf32>
    %117 = arith.maximumf %115, %116 : vector<1x128xf32>
    %118 = vector.extract_strided_slice %102 {offsets = [9, 0], sizes = [1, 128], strides = [1, 1]} : vector<16x128xf32> to vector<1x128xf32>
    %119 = vector.extract_strided_slice %102 {offsets = [10, 0], sizes = [1, 128], strides = [1, 1]} : vector<16x128xf32> to vector<1x128xf32>
    %120 = arith.maximumf %118, %119 : vector<1x128xf32>
    %121 = vector.extract_strided_slice %102 {offsets = [11, 0], sizes = [1, 128], strides = [1, 1]} : vector<16x128xf32> to vector<1x128xf32>
    %122 = arith.maximumf %120, %121 : vector<1x128xf32>
    %123 = vector.extract_strided_slice %102 {offsets = [12, 0], sizes = [1, 128], strides = [1, 1]} : vector<16x128xf32> to vector<1x128xf32>
    %124 = vector.extract_strided_slice %102 {offsets = [13, 0], sizes = [1, 128], strides = [1, 1]} : vector<16x128xf32> to vector<1x128xf32>
    %125 = arith.maximumf %123, %124 : vector<1x128xf32>
    %126 = vector.extract_strided_slice %102 {offsets = [14, 0], sizes = [1, 128], strides = [1, 1]} : vector<16x128xf32> to vector<1x128xf32>
    %127 = arith.maximumf %125, %126 : vector<1x128xf32>
    %128 = tpu.concatenate %107, %112, %117, %122, %127 in 0 : vector<1x128xf32>, vector<1x128xf32>, vector<1x128xf32>, vector<1x128xf32>, vector<1x128xf32> -> vector<5x128xf32>
    %c3 = arith.constant 3 : index
    %c0_20 = arith.constant 0 : index
    %129 = memref.load %arg1[%c3, %c0_20] : memref<8x3xf32, #tpu.memory_space<smem>>
    %130 = vector.extract_strided_slice %2 {offsets = [0, 0], sizes = [16, 128], strides = [1, 1]} : vector<18x128xf32> to vector<16x128xf32>
    %131 = vector.broadcast %129 : f32 to vector<16x128xf32>
    %132 = arith.mulf %131, %130 : vector<16x128xf32>
    %c3_21 = arith.constant 3 : index
    %c1_22 = arith.constant 1 : index
    %133 = memref.load %arg1[%c3_21, %c1_22] : memref<8x3xf32, #tpu.memory_space<smem>>
    %134 = vector.extract_strided_slice %2 {offsets = [1, 0], sizes = [16, 128], strides = [1, 1]} : vector<18x128xf32> to vector<16x128xf32>
    %135 = vector.broadcast %133 : f32 to vector<16x128xf32>
    %136 = arith.mulf %135, %134 : vector<16x128xf32>
    %137 = arith.addf %132, %136 : vector<16x128xf32>
    %c3_23 = arith.constant 3 : index
    %c2_24 = arith.constant 2 : index
    %138 = memref.load %arg1[%c3_23, %c2_24] : memref<8x3xf32, #tpu.memory_space<smem>>
    %139 = vector.extract_strided_slice %2 {offsets = [2, 0], sizes = [16, 128], strides = [1, 1]} : vector<18x128xf32> to vector<16x128xf32>
    %140 = vector.broadcast %138 : f32 to vector<16x128xf32>
    %141 = arith.mulf %140, %139 : vector<16x128xf32>
    %142 = arith.addf %137, %141 : vector<16x128xf32>
    %cst_25 = arith.constant 0.000000e+00 : f32
    %143 = vector.broadcast %cst_25 : f32 to vector<16x128xf32>
    %144 = arith.maximumf %142, %143 : vector<16x128xf32>
    %145 = vector.extract_strided_slice %144 {offsets = [0, 0], sizes = [1, 128], strides = [1, 1]} : vector<16x128xf32> to vector<1x128xf32>
    %146 = vector.extract_strided_slice %144 {offsets = [1, 0], sizes = [1, 128], strides = [1, 1]} : vector<16x128xf32> to vector<1x128xf32>
    %147 = arith.maximumf %145, %146 : vector<1x128xf32>
    %148 = vector.extract_strided_slice %144 {offsets = [2, 0], sizes = [1, 128], strides = [1, 1]} : vector<16x128xf32> to vector<1x128xf32>
    %149 = arith.maximumf %147, %148 : vector<1x128xf32>
    %150 = vector.extract_strided_slice %144 {offsets = [3, 0], sizes = [1, 128], strides = [1, 1]} : vector<16x128xf32> to vector<1x128xf32>
    %151 = vector.extract_strided_slice %144 {offsets = [4, 0], sizes = [1, 128], strides = [1, 1]} : vector<16x128xf32> to vector<1x128xf32>
    %152 = arith.maximumf %150, %151 : vector<1x128xf32>
    %153 = vector.extract_strided_slice %144 {offsets = [5, 0], sizes = [1, 128], strides = [1, 1]} : vector<16x128xf32> to vector<1x128xf32>
    %154 = arith.maximumf %152, %153 : vector<1x128xf32>
    %155 = vector.extract_strided_slice %144 {offsets = [6, 0], sizes = [1, 128], strides = [1, 1]} : vector<16x128xf32> to vector<1x128xf32>
    %156 = vector.extract_strided_slice %144 {offsets = [7, 0], sizes = [1, 128], strides = [1, 1]} : vector<16x128xf32> to vector<1x128xf32>
    %157 = arith.maximumf %155, %156 : vector<1x128xf32>
    %158 = vector.extract_strided_slice %144 {offsets = [8, 0], sizes = [1, 128], strides = [1, 1]} : vector<16x128xf32> to vector<1x128xf32>
    %159 = arith.maximumf %157, %158 : vector<1x128xf32>
    %160 = vector.extract_strided_slice %144 {offsets = [9, 0], sizes = [1, 128], strides = [1, 1]} : vector<16x128xf32> to vector<1x128xf32>
    %161 = vector.extract_strided_slice %144 {offsets = [10, 0], sizes = [1, 128], strides = [1, 1]} : vector<16x128xf32> to vector<1x128xf32>
    %162 = arith.maximumf %160, %161 : vector<1x128xf32>
    %163 = vector.extract_strided_slice %144 {offsets = [11, 0], sizes = [1, 128], strides = [1, 1]} : vector<16x128xf32> to vector<1x128xf32>
    %164 = arith.maximumf %162, %163 : vector<1x128xf32>
    %165 = vector.extract_strided_slice %144 {offsets = [12, 0], sizes = [1, 128], strides = [1, 1]} : vector<16x128xf32> to vector<1x128xf32>
    %166 = vector.extract_strided_slice %144 {offsets = [13, 0], sizes = [1, 128], strides = [1, 1]} : vector<16x128xf32> to vector<1x128xf32>
    %167 = arith.maximumf %165, %166 : vector<1x128xf32>
    %168 = vector.extract_strided_slice %144 {offsets = [14, 0], sizes = [1, 128], strides = [1, 1]} : vector<16x128xf32> to vector<1x128xf32>
    %169 = arith.maximumf %167, %168 : vector<1x128xf32>
    %170 = tpu.concatenate %149, %154, %159, %164, %169 in 0 : vector<1x128xf32>, vector<1x128xf32>, vector<1x128xf32>, vector<1x128xf32>, vector<1x128xf32> -> vector<5x128xf32>
    %c4 = arith.constant 4 : index
    %c0_26 = arith.constant 0 : index
    %171 = memref.load %arg1[%c4, %c0_26] : memref<8x3xf32, #tpu.memory_space<smem>>
    %172 = vector.extract_strided_slice %2 {offsets = [0, 0], sizes = [16, 128], strides = [1, 1]} : vector<18x128xf32> to vector<16x128xf32>
    %173 = vector.broadcast %171 : f32 to vector<16x128xf32>
    %174 = arith.mulf %173, %172 : vector<16x128xf32>
    %c4_27 = arith.constant 4 : index
    %c1_28 = arith.constant 1 : index
    %175 = memref.load %arg1[%c4_27, %c1_28] : memref<8x3xf32, #tpu.memory_space<smem>>
    %176 = vector.extract_strided_slice %2 {offsets = [1, 0], sizes = [16, 128], strides = [1, 1]} : vector<18x128xf32> to vector<16x128xf32>
    %177 = vector.broadcast %175 : f32 to vector<16x128xf32>
    %178 = arith.mulf %177, %176 : vector<16x128xf32>
    %179 = arith.addf %174, %178 : vector<16x128xf32>
    %c4_29 = arith.constant 4 : index
    %c2_30 = arith.constant 2 : index
    %180 = memref.load %arg1[%c4_29, %c2_30] : memref<8x3xf32, #tpu.memory_space<smem>>
    %181 = vector.extract_strided_slice %2 {offsets = [2, 0], sizes = [16, 128], strides = [1, 1]} : vector<18x128xf32> to vector<16x128xf32>
    %182 = vector.broadcast %180 : f32 to vector<16x128xf32>
    %183 = arith.mulf %182, %181 : vector<16x128xf32>
    %184 = arith.addf %179, %183 : vector<16x128xf32>
    %cst_31 = arith.constant 0.000000e+00 : f32
    %185 = vector.broadcast %cst_31 : f32 to vector<16x128xf32>
    %186 = arith.maximumf %184, %185 : vector<16x128xf32>
    %187 = vector.extract_strided_slice %186 {offsets = [0, 0], sizes = [1, 128], strides = [1, 1]} : vector<16x128xf32> to vector<1x128xf32>
    %188 = vector.extract_strided_slice %186 {offsets = [1, 0], sizes = [1, 128], strides = [1, 1]} : vector<16x128xf32> to vector<1x128xf32>
    %189 = arith.maximumf %187, %188 : vector<1x128xf32>
    %190 = vector.extract_strided_slice %186 {offsets = [2, 0], sizes = [1, 128], strides = [1, 1]} : vector<16x128xf32> to vector<1x128xf32>
    %191 = arith.maximumf %189, %190 : vector<1x128xf32>
    %192 = vector.extract_strided_slice %186 {offsets = [3, 0], sizes = [1, 128], strides = [1, 1]} : vector<16x128xf32> to vector<1x128xf32>
    %193 = vector.extract_strided_slice %186 {offsets = [4, 0], sizes = [1, 128], strides = [1, 1]} : vector<16x128xf32> to vector<1x128xf32>
    %194 = arith.maximumf %192, %193 : vector<1x128xf32>
    %195 = vector.extract_strided_slice %186 {offsets = [5, 0], sizes = [1, 128], strides = [1, 1]} : vector<16x128xf32> to vector<1x128xf32>
    %196 = arith.maximumf %194, %195 : vector<1x128xf32>
    %197 = vector.extract_strided_slice %186 {offsets = [6, 0], sizes = [1, 128], strides = [1, 1]} : vector<16x128xf32> to vector<1x128xf32>
    %198 = vector.extract_strided_slice %186 {offsets = [7, 0], sizes = [1, 128], strides = [1, 1]} : vector<16x128xf32> to vector<1x128xf32>
    %199 = arith.maximumf %197, %198 : vector<1x128xf32>
    %200 = vector.extract_strided_slice %186 {offsets = [8, 0], sizes = [1, 128], strides = [1, 1]} : vector<16x128xf32> to vector<1x128xf32>
    %201 = arith.maximumf %199, %200 : vector<1x128xf32>
    %202 = vector.extract_strided_slice %186 {offsets = [9, 0], sizes = [1, 128], strides = [1, 1]} : vector<16x128xf32> to vector<1x128xf32>
    %203 = vector.extract_strided_slice %186 {offsets = [10, 0], sizes = [1, 128], strides = [1, 1]} : vector<16x128xf32> to vector<1x128xf32>
    %204 = arith.maximumf %202, %203 : vector<1x128xf32>
    %205 = vector.extract_strided_slice %186 {offsets = [11, 0], sizes = [1, 128], strides = [1, 1]} : vector<16x128xf32> to vector<1x128xf32>
    %206 = arith.maximumf %204, %205 : vector<1x128xf32>
    %207 = vector.extract_strided_slice %186 {offsets = [12, 0], sizes = [1, 128], strides = [1, 1]} : vector<16x128xf32> to vector<1x128xf32>
    %208 = vector.extract_strided_slice %186 {offsets = [13, 0], sizes = [1, 128], strides = [1, 1]} : vector<16x128xf32> to vector<1x128xf32>
    %209 = arith.maximumf %207, %208 : vector<1x128xf32>
    %210 = vector.extract_strided_slice %186 {offsets = [14, 0], sizes = [1, 128], strides = [1, 1]} : vector<16x128xf32> to vector<1x128xf32>
    %211 = arith.maximumf %209, %210 : vector<1x128xf32>
    %212 = tpu.concatenate %191, %196, %201, %206, %211 in 0 : vector<1x128xf32>, vector<1x128xf32>, vector<1x128xf32>, vector<1x128xf32>, vector<1x128xf32> -> vector<5x128xf32>
    %c5 = arith.constant 5 : index
    %c0_32 = arith.constant 0 : index
    %213 = memref.load %arg1[%c5, %c0_32] : memref<8x3xf32, #tpu.memory_space<smem>>
    %214 = vector.extract_strided_slice %2 {offsets = [0, 0], sizes = [16, 128], strides = [1, 1]} : vector<18x128xf32> to vector<16x128xf32>
    %215 = vector.broadcast %213 : f32 to vector<16x128xf32>
    %216 = arith.mulf %215, %214 : vector<16x128xf32>
    %c5_33 = arith.constant 5 : index
    %c1_34 = arith.constant 1 : index
    %217 = memref.load %arg1[%c5_33, %c1_34] : memref<8x3xf32, #tpu.memory_space<smem>>
    %218 = vector.extract_strided_slice %2 {offsets = [1, 0], sizes = [16, 128], strides = [1, 1]} : vector<18x128xf32> to vector<16x128xf32>
    %219 = vector.broadcast %217 : f32 to vector<16x128xf32>
    %220 = arith.mulf %219, %218 : vector<16x128xf32>
    %221 = arith.addf %216, %220 : vector<16x128xf32>
    %c5_35 = arith.constant 5 : index
    %c2_36 = arith.constant 2 : index
    %222 = memref.load %arg1[%c5_35, %c2_36] : memref<8x3xf32, #tpu.memory_space<smem>>
    %223 = vector.extract_strided_slice %2 {offsets = [2, 0], sizes = [16, 128], strides = [1, 1]} : vector<18x128xf32> to vector<16x128xf32>
    %224 = vector.broadcast %222 : f32 to vector<16x128xf32>
    %225 = arith.mulf %224, %223 : vector<16x128xf32>
    %226 = arith.addf %221, %225 : vector<16x128xf32>
    %cst_37 = arith.constant 0.000000e+00 : f32
    %227 = vector.broadcast %cst_37 : f32 to vector<16x128xf32>
    %228 = arith.maximumf %226, %227 : vector<16x128xf32>
    %229 = vector.extract_strided_slice %228 {offsets = [0, 0], sizes = [1, 128], strides = [1, 1]} : vector<16x128xf32> to vector<1x128xf32>
    %230 = vector.extract_strided_slice %228 {offsets = [1, 0], sizes = [1, 128], strides = [1, 1]} : vector<16x128xf32> to vector<1x128xf32>
    %231 = arith.maximumf %229, %230 : vector<1x128xf32>
    %232 = vector.extract_strided_slice %228 {offsets = [2, 0], sizes = [1, 128], strides = [1, 1]} : vector<16x128xf32> to vector<1x128xf32>
    %233 = arith.maximumf %231, %232 : vector<1x128xf32>
    %234 = vector.extract_strided_slice %228 {offsets = [3, 0], sizes = [1, 128], strides = [1, 1]} : vector<16x128xf32> to vector<1x128xf32>
    %235 = vector.extract_strided_slice %228 {offsets = [4, 0], sizes = [1, 128], strides = [1, 1]} : vector<16x128xf32> to vector<1x128xf32>
    %236 = arith.maximumf %234, %235 : vector<1x128xf32>
    %237 = vector.extract_strided_slice %228 {offsets = [5, 0], sizes = [1, 128], strides = [1, 1]} : vector<16x128xf32> to vector<1x128xf32>
    %238 = arith.maximumf %236, %237 : vector<1x128xf32>
    %239 = vector.extract_strided_slice %228 {offsets = [6, 0], sizes = [1, 128], strides = [1, 1]} : vector<16x128xf32> to vector<1x128xf32>
    %240 = vector.extract_strided_slice %228 {offsets = [7, 0], sizes = [1, 128], strides = [1, 1]} : vector<16x128xf32> to vector<1x128xf32>
    %241 = arith.maximumf %239, %240 : vector<1x128xf32>
    %242 = vector.extract_strided_slice %228 {offsets = [8, 0], sizes = [1, 128], strides = [1, 1]} : vector<16x128xf32> to vector<1x128xf32>
    %243 = arith.maximumf %241, %242 : vector<1x128xf32>
    %244 = vector.extract_strided_slice %228 {offsets = [9, 0], sizes = [1, 128], strides = [1, 1]} : vector<16x128xf32> to vector<1x128xf32>
    %245 = vector.extract_strided_slice %228 {offsets = [10, 0], sizes = [1, 128], strides = [1, 1]} : vector<16x128xf32> to vector<1x128xf32>
    %246 = arith.maximumf %244, %245 : vector<1x128xf32>
    %247 = vector.extract_strided_slice %228 {offsets = [11, 0], sizes = [1, 128], strides = [1, 1]} : vector<16x128xf32> to vector<1x128xf32>
    %248 = arith.maximumf %246, %247 : vector<1x128xf32>
    %249 = vector.extract_strided_slice %228 {offsets = [12, 0], sizes = [1, 128], strides = [1, 1]} : vector<16x128xf32> to vector<1x128xf32>
    %250 = vector.extract_strided_slice %228 {offsets = [13, 0], sizes = [1, 128], strides = [1, 1]} : vector<16x128xf32> to vector<1x128xf32>
    %251 = arith.maximumf %249, %250 : vector<1x128xf32>
    %252 = vector.extract_strided_slice %228 {offsets = [14, 0], sizes = [1, 128], strides = [1, 1]} : vector<16x128xf32> to vector<1x128xf32>
    %253 = arith.maximumf %251, %252 : vector<1x128xf32>
    %254 = tpu.concatenate %233, %238, %243, %248, %253 in 0 : vector<1x128xf32>, vector<1x128xf32>, vector<1x128xf32>, vector<1x128xf32>, vector<1x128xf32> -> vector<5x128xf32>
    %c6 = arith.constant 6 : index
    %c0_38 = arith.constant 0 : index
    %255 = memref.load %arg1[%c6, %c0_38] : memref<8x3xf32, #tpu.memory_space<smem>>
    %256 = vector.extract_strided_slice %2 {offsets = [0, 0], sizes = [16, 128], strides = [1, 1]} : vector<18x128xf32> to vector<16x128xf32>
    %257 = vector.broadcast %255 : f32 to vector<16x128xf32>
    %258 = arith.mulf %257, %256 : vector<16x128xf32>
    %c6_39 = arith.constant 6 : index
    %c1_40 = arith.constant 1 : index
    %259 = memref.load %arg1[%c6_39, %c1_40] : memref<8x3xf32, #tpu.memory_space<smem>>
    %260 = vector.extract_strided_slice %2 {offsets = [1, 0], sizes = [16, 128], strides = [1, 1]} : vector<18x128xf32> to vector<16x128xf32>
    %261 = vector.broadcast %259 : f32 to vector<16x128xf32>
    %262 = arith.mulf %261, %260 : vector<16x128xf32>
    %263 = arith.addf %258, %262 : vector<16x128xf32>
    %c6_41 = arith.constant 6 : index
    %c2_42 = arith.constant 2 : index
    %264 = memref.load %arg1[%c6_41, %c2_42] : memref<8x3xf32, #tpu.memory_space<smem>>
    %265 = vector.extract_strided_slice %2 {offsets = [2, 0], sizes = [16, 128], strides = [1, 1]} : vector<18x128xf32> to vector<16x128xf32>
    %266 = vector.broadcast %264 : f32 to vector<16x128xf32>
    %267 = arith.mulf %266, %265 : vector<16x128xf32>
    %268 = arith.addf %263, %267 : vector<16x128xf32>
    %cst_43 = arith.constant 0.000000e+00 : f32
    %269 = vector.broadcast %cst_43 : f32 to vector<16x128xf32>
    %270 = arith.maximumf %268, %269 : vector<16x128xf32>
    %271 = vector.extract_strided_slice %270 {offsets = [0, 0], sizes = [1, 128], strides = [1, 1]} : vector<16x128xf32> to vector<1x128xf32>
    %272 = vector.extract_strided_slice %270 {offsets = [1, 0], sizes = [1, 128], strides = [1, 1]} : vector<16x128xf32> to vector<1x128xf32>
    %273 = arith.maximumf %271, %272 : vector<1x128xf32>
    %274 = vector.extract_strided_slice %270 {offsets = [2, 0], sizes = [1, 128], strides = [1, 1]} : vector<16x128xf32> to vector<1x128xf32>
    %275 = arith.maximumf %273, %274 : vector<1x128xf32>
    %276 = vector.extract_strided_slice %270 {offsets = [3, 0], sizes = [1, 128], strides = [1, 1]} : vector<16x128xf32> to vector<1x128xf32>
    %277 = vector.extract_strided_slice %270 {offsets = [4, 0], sizes = [1, 128], strides = [1, 1]} : vector<16x128xf32> to vector<1x128xf32>
    %278 = arith.maximumf %276, %277 : vector<1x128xf32>
    %279 = vector.extract_strided_slice %270 {offsets = [5, 0], sizes = [1, 128], strides = [1, 1]} : vector<16x128xf32> to vector<1x128xf32>
    %280 = arith.maximumf %278, %279 : vector<1x128xf32>
    %281 = vector.extract_strided_slice %270 {offsets = [6, 0], sizes = [1, 128], strides = [1, 1]} : vector<16x128xf32> to vector<1x128xf32>
    %282 = vector.extract_strided_slice %270 {offsets = [7, 0], sizes = [1, 128], strides = [1, 1]} : vector<16x128xf32> to vector<1x128xf32>
    %283 = arith.maximumf %281, %282 : vector<1x128xf32>
    %284 = vector.extract_strided_slice %270 {offsets = [8, 0], sizes = [1, 128], strides = [1, 1]} : vector<16x128xf32> to vector<1x128xf32>
    %285 = arith.maximumf %283, %284 : vector<1x128xf32>
    %286 = vector.extract_strided_slice %270 {offsets = [9, 0], sizes = [1, 128], strides = [1, 1]} : vector<16x128xf32> to vector<1x128xf32>
    %287 = vector.extract_strided_slice %270 {offsets = [10, 0], sizes = [1, 128], strides = [1, 1]} : vector<16x128xf32> to vector<1x128xf32>
    %288 = arith.maximumf %286, %287 : vector<1x128xf32>
    %289 = vector.extract_strided_slice %270 {offsets = [11, 0], sizes = [1, 128], strides = [1, 1]} : vector<16x128xf32> to vector<1x128xf32>
    %290 = arith.maximumf %288, %289 : vector<1x128xf32>
    %291 = vector.extract_strided_slice %270 {offsets = [12, 0], sizes = [1, 128], strides = [1, 1]} : vector<16x128xf32> to vector<1x128xf32>
    %292 = vector.extract_strided_slice %270 {offsets = [13, 0], sizes = [1, 128], strides = [1, 1]} : vector<16x128xf32> to vector<1x128xf32>
    %293 = arith.maximumf %291, %292 : vector<1x128xf32>
    %294 = vector.extract_strided_slice %270 {offsets = [14, 0], sizes = [1, 128], strides = [1, 1]} : vector<16x128xf32> to vector<1x128xf32>
    %295 = arith.maximumf %293, %294 : vector<1x128xf32>
    %296 = tpu.concatenate %275, %280, %285, %290, %295 in 0 : vector<1x128xf32>, vector<1x128xf32>, vector<1x128xf32>, vector<1x128xf32>, vector<1x128xf32> -> vector<5x128xf32>
    %c7 = arith.constant 7 : index
    %c0_44 = arith.constant 0 : index
    %297 = memref.load %arg1[%c7, %c0_44] : memref<8x3xf32, #tpu.memory_space<smem>>
    %298 = vector.extract_strided_slice %2 {offsets = [0, 0], sizes = [16, 128], strides = [1, 1]} : vector<18x128xf32> to vector<16x128xf32>
    %299 = vector.broadcast %297 : f32 to vector<16x128xf32>
    %300 = arith.mulf %299, %298 : vector<16x128xf32>
    %c7_45 = arith.constant 7 : index
    %c1_46 = arith.constant 1 : index
    %301 = memref.load %arg1[%c7_45, %c1_46] : memref<8x3xf32, #tpu.memory_space<smem>>
    %302 = vector.extract_strided_slice %2 {offsets = [1, 0], sizes = [16, 128], strides = [1, 1]} : vector<18x128xf32> to vector<16x128xf32>
    %303 = vector.broadcast %301 : f32 to vector<16x128xf32>
    %304 = arith.mulf %303, %302 : vector<16x128xf32>
    %305 = arith.addf %300, %304 : vector<16x128xf32>
    %c7_47 = arith.constant 7 : index
    %c2_48 = arith.constant 2 : index
    %306 = memref.load %arg1[%c7_47, %c2_48] : memref<8x3xf32, #tpu.memory_space<smem>>
    %307 = vector.extract_strided_slice %2 {offsets = [2, 0], sizes = [16, 128], strides = [1, 1]} : vector<18x128xf32> to vector<16x128xf32>
    %308 = vector.broadcast %306 : f32 to vector<16x128xf32>
    %309 = arith.mulf %308, %307 : vector<16x128xf32>
    %310 = arith.addf %305, %309 : vector<16x128xf32>
    %cst_49 = arith.constant 0.000000e+00 : f32
    %311 = vector.broadcast %cst_49 : f32 to vector<16x128xf32>
    %312 = arith.maximumf %310, %311 : vector<16x128xf32>
    %313 = vector.extract_strided_slice %312 {offsets = [0, 0], sizes = [1, 128], strides = [1, 1]} : vector<16x128xf32> to vector<1x128xf32>
    %314 = vector.extract_strided_slice %312 {offsets = [1, 0], sizes = [1, 128], strides = [1, 1]} : vector<16x128xf32> to vector<1x128xf32>
    %315 = arith.maximumf %313, %314 : vector<1x128xf32>
    %316 = vector.extract_strided_slice %312 {offsets = [2, 0], sizes = [1, 128], strides = [1, 1]} : vector<16x128xf32> to vector<1x128xf32>
    %317 = arith.maximumf %315, %316 : vector<1x128xf32>
    %318 = vector.extract_strided_slice %312 {offsets = [3, 0], sizes = [1, 128], strides = [1, 1]} : vector<16x128xf32> to vector<1x128xf32>
    %319 = vector.extract_strided_slice %312 {offsets = [4, 0], sizes = [1, 128], strides = [1, 1]} : vector<16x128xf32> to vector<1x128xf32>
    %320 = arith.maximumf %318, %319 : vector<1x128xf32>
    %321 = vector.extract_strided_slice %312 {offsets = [5, 0], sizes = [1, 128], strides = [1, 1]} : vector<16x128xf32> to vector<1x128xf32>
    %322 = arith.maximumf %320, %321 : vector<1x128xf32>
    %323 = vector.extract_strided_slice %312 {offsets = [6, 0], sizes = [1, 128], strides = [1, 1]} : vector<16x128xf32> to vector<1x128xf32>
    %324 = vector.extract_strided_slice %312 {offsets = [7, 0], sizes = [1, 128], strides = [1, 1]} : vector<16x128xf32> to vector<1x128xf32>
    %325 = arith.maximumf %323, %324 : vector<1x128xf32>
    %326 = vector.extract_strided_slice %312 {offsets = [8, 0], sizes = [1, 128], strides = [1, 1]} : vector<16x128xf32> to vector<1x128xf32>
    %327 = arith.maximumf %325, %326 : vector<1x128xf32>
    %328 = vector.extract_strided_slice %312 {offsets = [9, 0], sizes = [1, 128], strides = [1, 1]} : vector<16x128xf32> to vector<1x128xf32>
    %329 = vector.extract_strided_slice %312 {offsets = [10, 0], sizes = [1, 128], strides = [1, 1]} : vector<16x128xf32> to vector<1x128xf32>
    %330 = arith.maximumf %328, %329 : vector<1x128xf32>
    %331 = vector.extract_strided_slice %312 {offsets = [11, 0], sizes = [1, 128], strides = [1, 1]} : vector<16x128xf32> to vector<1x128xf32>
    %332 = arith.maximumf %330, %331 : vector<1x128xf32>
    %333 = vector.extract_strided_slice %312 {offsets = [12, 0], sizes = [1, 128], strides = [1, 1]} : vector<16x128xf32> to vector<1x128xf32>
    %334 = vector.extract_strided_slice %312 {offsets = [13, 0], sizes = [1, 128], strides = [1, 1]} : vector<16x128xf32> to vector<1x128xf32>
    %335 = arith.maximumf %333, %334 : vector<1x128xf32>
    %336 = vector.extract_strided_slice %312 {offsets = [14, 0], sizes = [1, 128], strides = [1, 1]} : vector<16x128xf32> to vector<1x128xf32>
    %337 = arith.maximumf %335, %336 : vector<1x128xf32>
    %338 = tpu.concatenate %317, %322, %327, %332, %337 in 0 : vector<1x128xf32>, vector<1x128xf32>, vector<1x128xf32>, vector<1x128xf32>, vector<1x128xf32> -> vector<5x128xf32>
    %339 = vector.shape_cast %44 : vector<5x128xf32> to vector<1x5x128xf32>
    %340 = vector.shape_cast %86 : vector<5x128xf32> to vector<1x5x128xf32>
    %341 = vector.shape_cast %128 : vector<5x128xf32> to vector<1x5x128xf32>
    %342 = vector.shape_cast %170 : vector<5x128xf32> to vector<1x5x128xf32>
    %343 = vector.shape_cast %212 : vector<5x128xf32> to vector<1x5x128xf32>
    %344 = vector.shape_cast %254 : vector<5x128xf32> to vector<1x5x128xf32>
    %345 = vector.shape_cast %296 : vector<5x128xf32> to vector<1x5x128xf32>
    %346 = vector.shape_cast %338 : vector<5x128xf32> to vector<1x5x128xf32>
    %347 = tpu.concatenate %339, %340, %341, %342, %343, %344, %345, %346 in 0 : vector<1x5x128xf32>, vector<1x5x128xf32>, vector<1x5x128xf32>, vector<1x5x128xf32>, vector<1x5x128xf32>, vector<1x5x128xf32>, vector<1x5x128xf32>, vector<1x5x128xf32> -> vector<8x5x128xf32>
    %348 = vector.extract_strided_slice %347 {offsets = [0, 0, 0], sizes = [8, 1, 128], strides = [1, 1, 1]} : vector<8x5x128xf32> to vector<8x1x128xf32>
    %349 = vector.extract_strided_slice %347 {offsets = [0, 1, 0], sizes = [8, 1, 128], strides = [1, 1, 1]} : vector<8x5x128xf32> to vector<8x1x128xf32>
    %350 = arith.maximumf %348, %349 : vector<8x1x128xf32>
    %351 = vector.extract_strided_slice %347 {offsets = [0, 2, 0], sizes = [8, 1, 128], strides = [1, 1, 1]} : vector<8x5x128xf32> to vector<8x1x128xf32>
    %352 = arith.maximumf %350, %351 : vector<8x1x128xf32>
    %353 = vector.extract_strided_slice %347 {offsets = [0, 3, 0], sizes = [8, 1, 128], strides = [1, 1, 1]} : vector<8x5x128xf32> to vector<8x1x128xf32>
    %354 = arith.maximumf %352, %353 : vector<8x1x128xf32>
    %355 = vector.extract_strided_slice %347 {offsets = [0, 4, 0], sizes = [8, 1, 128], strides = [1, 1, 1]} : vector<8x5x128xf32> to vector<8x1x128xf32>
    %356 = arith.maximumf %354, %355 : vector<8x1x128xf32>
    %357 = vector.broadcast %356 : vector<8x1x128xf32> to vector<8x5x128xf32>
    %358 = arith.subf %347, %357 : vector<8x5x128xf32>
    %359 = math.exp %358 : vector<8x5x128xf32>
    %360 = vector.extract_strided_slice %359 {offsets = [0, 0, 0], sizes = [8, 1, 128], strides = [1, 1, 1]} : vector<8x5x128xf32> to vector<8x1x128xf32>
    %361 = vector.extract_strided_slice %359 {offsets = [0, 1, 0], sizes = [8, 1, 128], strides = [1, 1, 1]} : vector<8x5x128xf32> to vector<8x1x128xf32>
    %362 = arith.addf %360, %361 : vector<8x1x128xf32>
    %363 = vector.extract_strided_slice %359 {offsets = [0, 2, 0], sizes = [8, 1, 128], strides = [1, 1, 1]} : vector<8x5x128xf32> to vector<8x1x128xf32>
    %364 = arith.addf %362, %363 : vector<8x1x128xf32>
    %365 = vector.extract_strided_slice %359 {offsets = [0, 3, 0], sizes = [8, 1, 128], strides = [1, 1, 1]} : vector<8x5x128xf32> to vector<8x1x128xf32>
    %366 = arith.addf %364, %365 : vector<8x1x128xf32>
    %367 = vector.extract_strided_slice %359 {offsets = [0, 4, 0], sizes = [8, 1, 128], strides = [1, 1, 1]} : vector<8x5x128xf32> to vector<8x1x128xf32>
    %368 = arith.addf %366, %367 : vector<8x1x128xf32>
    %369 = tpu.reciprocal %368 {approx = true} : vector<8x1x128xf32> -> vector<8x1x128xf32>
    %370 = arith.mulf %368, %369 : vector<8x1x128xf32>
    %cst_50 = arith.constant 2.000000e+00 : f32
    %371 = vector.broadcast %cst_50 : f32 to vector<8x1x128xf32>
    %372 = arith.subf %371, %370 : vector<8x1x128xf32>
    %373 = arith.mulf %369, %372 : vector<8x1x128xf32>
    %374 = vector.broadcast %373 : vector<8x1x128xf32> to vector<8x5x128xf32>
    %375 = arith.mulf %359, %374 : vector<8x5x128xf32>
    %c0_51 = arith.constant 0 : index
    %c0_52 = arith.constant 0 : index
    %c0_53 = arith.constant 0 : index
    %376 = vector.load %arg3[%c0_51, %c0_52, %c0_53] : memref<8x5x128xf32, #tpu.memory_space<vmem>>, vector<8x5x128xf32>
    tpu.vector_store %arg3[%c0_51, %c0_52, %c0_53], %375 {strides = array<i32>} : memref<8x5x128xf32, #tpu.memory_space<vmem>>, vector<8x5x128xf32>,
    return
  }
  func.func @transform_0(%arg0: i32) -> (i32, i32) {
    %c0_i32 = arith.constant 0 : i32
    %c0_i32_0 = arith.constant 0 : i32
    %c0_i32_1 = arith.constant 0 : i32
    return %c0_i32, %c0_i32_0 : i32, i32
  }
  func.func @transform_1(%arg0: i32) -> (i32, i32) {
    %c0_i32 = arith.constant 0 : i32
    %c0_i32_0 = arith.constant 0 : i32
    return %c0_i32, %arg0 : i32, i32
  }
  func.func @transform_2(%arg0: i32) -> (i32, i32, i32) {
    %c0_i32 = arith.constant 0 : i32
    %c0_i32_0 = arith.constant 0 : i32
    %c0_i32_1 = arith.constant 0 : i32
    return %c0_i32, %c0_i32_0, %arg0 : i32, i32, i32
  }
}

</mosaic_0001>

<llo_original>
// kernel: tpu_custom_call.1
$region0: #{tpu_custom_call.1}
  #allocation0 [shape = 'u32[]', space=smem, size = 0x4, offset = 0x4, fixed_abs, tag = 'smem constant byte address 0x4 - core index']
  #allocation1 [shape = 'u32[144,128]{1,0:T(1,128)}', space=vmem, size = 0x12000, scoped, tag = 'internal scratch']
  %s0 = inlined_call_operand.vmem [shape: f32[8,3], index: 0, kind: input, shape index: {}]
  %s1 = inlined_call_operand.hbm [shape: f32[16,128], index: 1, kind: input, shape index: {}]
  %s2 = inlined_call_operand.vmem [shape: f32[8,5,128], index: 2, kind: output, shape index: {}]
  %s3 = sld [smem:[#allocation0]]
  $region26: #{tpu_custom_call.1} parent=0
    _
  %s5 = ssub.s32 1, %s3
  %s6 = scalar_select 0, %s5, %s3
  $region1: #{tpu_custom_call.1} parent=0
    #allocation2 [shape = 'u8[4096]{0}', space=smem, size = 0x1000, scoped, tag = 'input window, operand 0, single buffered']
    #allocation3 [shape = 's32[1]{0}', space=sflag, size = 0x4, scoped, tag = 'scoped memory for tpu_custom_call.1']
    #allocation4 [shape = 's32[1]{0}', space=sflag, size = 0x4, scoped, tag = 'scoped memory for tpu_custom_call.1']
    #allocation5 [shape = 'u8[8192]{0}', space=vmem, size = 0x2000, scoped, tag = 'input window, operand 1, single buffered']
    %7 = vsyncpa [#allocation4], 0
    %8 = vsyncpa [#allocation3], 0
    // Predicated region
    $region2: #{tpu_custom_call.1} parent=1 // pred_check
      _
    $region3: #{tpu_custom_call.1} parent=1 // pred_check_branch
      %10 = sbr.rel (0) target = $region5
    $region4: #{tpu_custom_call.1} parent=1 // pred_region
      %s12 = ssub.s32 128, 128
      %13 = vsyncadd [#allocation4], %s12
      %s15 = sshll.u32 %s0, 4
      %s16 = int_to_ptr.vmem [resolvable:$true] %s15
      %18 = dma.vmem_to_smem %s16, 128, [#allocation2], [#allocation4]
    $region5: #{tpu_custom_call.1} parent=1 // pred_fallthru
      _
    // Predicated region
    $region6: #{tpu_custom_call.1} parent=1 // pred_check
      _
    $region7: #{tpu_custom_call.1} parent=1 // pred_check_branch
      %20 = sbr.rel (0) target = $region9
    $region8: #{tpu_custom_call.1} parent=1 // pred_region
      %s22 = ssub.s32 256, 256
      %23 = vsyncadd [#allocation3], %s22
      %s24 = sshll.u32 [#allocation5], 4
      %s25 = int_to_ptr.vmem [resolvable:$true] %s24
      %30 = dma.hbm_to_vmem [thread:$0]  %s1, 256, %s25, [#allocation3], 128, 128, 8
    $region9: #{tpu_custom_call.1} parent=1 // pred_fallthru
      _
    // Predicated region
    $region10: #{tpu_custom_call.1} parent=1 // pred_check
      _
    $region11: #{tpu_custom_call.1} parent=1 // pred_check_branch
      %32 = sbr.rel (0) target = $region13
    $region12: #{tpu_custom_call.1} parent=1 // pred_region
      %33 = dma.done [#allocation4], 128
    $region13: #{tpu_custom_call.1} parent=1 // pred_fallthru
      _
    // Predicated region
    $region14: #{tpu_custom_call.1} parent=1 // pred_check
      _
    $region15: #{tpu_custom_call.1} parent=1 // pred_check_branch
      %35 = sbr.rel (0) target = $region17
    $region16: #{tpu_custom_call.1} parent=1 // pred_region
      %36 = dma.done [#allocation3], 256
    $region17: #{tpu_custom_call.1} parent=1 // pred_fallthru
      _
    %37 = sfence
    %v38 = vld [vmem:[#allocation5] sm:$0xff]
    %v39 = vld [vmem:[#allocation5 + $0x8] sm:$0xff]
    %vm42 = vcmask 1040384
    %v43 = vrot.slane %v38, 7
    %v44 = vrot.slane %v39, 7
    %v45 = vsel %vm42, %v43, %v44
    %v49 = vsel %vm42, 0.0, %v43
    %v50 = vsel %vm42, %v44, 0.0
    %s51 = sld [smem:[#allocation2]]
    %v52 = vstv %s51
    %v53 = vmul.f32 %v52, %v49
    %v54 = vmul.f32 %v52, %v45
    %s55 = sld [smem:[#allocation2 + $0x1]]
    %v56 = vstv %s55
    %v57 = vmul.f32 %v56, %v49
    %v58 = vmul.f32 %v56, %v45
    %v59 = vmul.f32 %v56, %v50
    %vm63 = vcmask 1046528
    %v64 = vrot.slane %v57, 1
    %v65 = vrot.slane %v58, 1
    %v66 = vsel %vm63, %v64, %v65
    %v67 = vrot.slane %v59, 1
    %v68 = vsel %vm63, %v65, %v67
    %v71 = vadd.f32 %v53, %v66
    %v72 = vadd.f32 %v54, %v68
    %s73 = sld [smem:[#allocation2 + $0x2]]
    %v74 = vstv %s73
    %v75 = vmul.f32 %v74, %v49
    %v76 = vmul.f32 %v74, %v45
    %v77 = vmul.f32 %v74, %v50
    %vm81 = vcmask 1045504
    %v82 = vrot.slane %v75, 2
    %v83 = vrot.slane %v76, 2
    %v84 = vsel %vm81, %v82, %v83
    %v85 = vrot.slane %v77, 2
    %v86 = vsel %vm81, %v83, %v85
    %v89 = vadd.f32 %v71, %v84
    %v90 = vadd.f32 %v72, %v86
    %v91 = vmax.f32 %v89, 0.0
    %v92 = vmax.f32 %v90, 0.0
    %v94 = vrot.slane %v91, 1
    %v96 = vmax.f32 %v91, %v94
    %v97 = vrot.slane %v91, 2
    %v99 = vmax.f32 %v96, %v97
    %v101 = vrot.slane %v92, 2
    %v103 = vmax.f32 %v96, %v101
    %v104 = vrot.slane %v92, 1
    %v106 = vmax.f32 %v92, %v104
    %v107 = vmax.f32 %v106, %v101
    %v109 = vrot.slane %v99, 2
    %v112 = vrot.slane %v103, 4
    %v115 = vrot.slane %v107, 6
    %v117 = vsel %vm42, %v99, %v109
    %vm118 = vcmask 1041408
    %v119 = vsel %vm118, %v117, %v112
    %vm120 = vcmask 1042432
    %v121 = vsel %vm120, %v119, %v115
    %vm122 = vcmask 1043456
    %v123 = vsel %vm122, %v121, %v107
    %s124 = sld [smem:[#allocation2 + $0x80]]
    %v125 = vstv %s124
    %v126 = vmul.f32 %v125, %v49
    %v127 = vmul.f32 %v125, %v45
    %s128 = sld [smem:[#allocation2 + $0x81]]
    %v129 = vstv %s128
    %v130 = vmul.f32 %v129, %v49
    %v131 = vmul.f32 %v129, %v45
    %v132 = vmul.f32 %v129, %v50
    %v136 = vrot.slane %v130, 1
    %v137 = vrot.slane %v131, 1
    %v138 = vsel %vm63, %v136, %v137
    %v139 = vrot.slane %v132, 1
    %v140 = vsel %vm63, %v137, %v139
    %v143 = vadd.f32 %v126, %v138
    %v144 = vadd.f32 %v127, %v140
    %s145 = sld [smem:[#allocation2 + $0x82]]
    %v146 = vstv %s145
    %v147 = vmul.f32 %v146, %v49
    %v148 = vmul.f32 %v146, %v45
    %v149 = vmul.f32 %v146, %v50
    %v153 = vrot.slane %v147, 2
    %v154 = vrot.slane %v148, 2
    %v155 = vsel %vm81, %v153, %v154
    %v156 = vrot.slane %v149, 2
    %v157 = vsel %vm81, %v154, %v156
    %v160 = vadd.f32 %v143, %v155
    %v161 = vadd.f32 %v144, %v157
    %v162 = vmax.f32 %v160, 0.0
    %v163 = vmax.f32 %v161, 0.0
    %v165 = vrot.slane %v162, 1
    %v167 = vmax.f32 %v162, %v165
    %v168 = vrot.slane %v162, 2
    %v170 = vmax.f32 %v167, %v168
    %v172 = vrot.slane %v163, 2
    %v174 = vmax.f32 %v167, %v172
    %v175 = vrot.slane %v163, 1
    %v177 = vmax.f32 %v163, %v175
    %v178 = vmax.f32 %v177, %v172
    %v180 = vrot.slane %v170, 2
    %v183 = vrot.slane %v174, 4
    %v186 = vrot.slane %v178, 6
    %v188 = vsel %vm42, %v170, %v180
    %v189 = vsel %vm118, %v188, %v183
    %v190 = vsel %vm120, %v189, %v186
    %v191 = vsel %vm122, %v190, %v178
    %s192 = sld [smem:[#allocation2 + $0x100]]
    %v193 = vstv %s192
    %v194 = vmul.f32 %v193, %v49
    %v195 = vmul.f32 %v193, %v45
    %s196 = sld [smem:[#allocation2 + $0x101]]
    %v197 = vstv %s196
    %v198 = vmul.f32 %v197, %v49
    %v199 = vmul.f32 %v197, %v45
    %v200 = vmul.f32 %v197, %v50
    %v204 = vrot.slane %v198, 1
    %v205 = vrot.slane %v199, 1
    %v206 = vsel %vm63, %v204, %v205
    %v207 = vrot.slane %v200, 1
    %v208 = vsel %vm63, %v205, %v207
    %v211 = vadd.f32 %v194, %v206
    %v212 = vadd.f32 %v195, %v208
    %s213 = sld [smem:[#allocation2 + $0x102]]
    %v214 = vstv %s213
    %v215 = vmul.f32 %v214, %v49
    %v216 = vmul.f32 %v214, %v45
    %v217 = vmul.f32 %v214, %v50
    %v221 = vrot.slane %v215, 2
    %v222 = vrot.slane %v216, 2
    %v223 = vsel %vm81, %v221, %v222
    %v224 = vrot.slane %v217, 2
    %v225 = vsel %vm81, %v222, %v224
    %v228 = vadd.f32 %v211, %v223
    %v229 = vadd.f32 %v212, %v225
    %v230 = vmax.f32 %v228, 0.0
    %v231 = vmax.f32 %v229, 0.0
    %v233 = vrot.slane %v230, 1
    %v235 = vmax.f32 %v230, %v233
    %v236 = vrot.slane %v230, 2
    %v238 = vmax.f32 %v235, %v236
    %v240 = vrot.slane %v231, 2
    %v242 = vmax.f32 %v235, %v240
    %v243 = vrot.slane %v231, 1
    %v245 = vmax.f32 %v231, %v243
    %v246 = vmax.f32 %v245, %v240
    %v248 = vrot.slane %v238, 2
    %v251 = vrot.slane %v242, 4
    %v254 = vrot.slane %v246, 6
    %v256 = vsel %vm42, %v238, %v248
    %v257 = vsel %vm118, %v256, %v251
    %v258 = vsel %vm120, %v257, %v254
    %v259 = vsel %vm122, %v258, %v246
    %s260 = sld [smem:[#allocation2 + $0x180]]
    %v261 = vstv %s260
    %v262 = vmul.f32 %v261, %v49
    %v263 = vmul.f32 %v261, %v45
    %s264 = sld [smem:[#allocation2 + $0x181]]
    %v265 = vstv %s264
    %v266 = vmul.f32 %v265, %v49
    %v267 = vmul.f32 %v265, %v45
    %v268 = vmul.f32 %v265, %v50
    %v272 = vrot.slane %v266, 1
    %v273 = vrot.slane %v267, 1
    %v274 = vsel %vm63, %v272, %v273
    %v275 = vrot.slane %v268, 1
    %v276 = vsel %vm63, %v273, %v275
    %v279 = vadd.f32 %v262, %v274
    %v280 = vadd.f32 %v263, %v276
    %s281 = sld [smem:[#allocation2 + $0x182]]
    %v282 = vstv %s281
    %v283 = vmul.f32 %v282, %v49
    %v284 = vmul.f32 %v282, %v45
    %v285 = vmul.f32 %v282, %v50
    %v289 = vrot.slane %v283, 2
    %v290 = vrot.slane %v284, 2
    %v291 = vsel %vm81, %v289, %v290
    %v292 = vrot.slane %v285, 2
    %v293 = vsel %vm81, %v290, %v292
    %v296 = vadd.f32 %v279, %v291
    %v297 = vadd.f32 %v280, %v293
    %v298 = vmax.f32 %v296, 0.0
    %v299 = vmax.f32 %v297, 0.0
    %v301 = vrot.slane %v298, 1
    %v303 = vmax.f32 %v298, %v301
    %v304 = vrot.slane %v298, 2
    %v306 = vmax.f32 %v303, %v304
    %v308 = vrot.slane %v299, 2
    %v310 = vmax.f32 %v303, %v308
    %v311 = vrot.slane %v299, 1
    %v313 = vmax.f32 %v299, %v311
    %v314 = vmax.f32 %v313, %v308
    %v316 = vrot.slane %v306, 2
    %v319 = vrot.slane %v310, 4
    %v322 = vrot.slane %v314, 6
    %v324 = vsel %vm42, %v306, %v316
    %v325 = vsel %vm118, %v324, %v319
    %v326 = vsel %vm120, %v325, %v322
    %v327 = vsel %vm122, %v326, %v314
    %s328 = sld [smem:[#allocation2 + $0x200]]
    %v329 = vstv %s328
    %v330 = vmul.f32 %v329, %v49
    %v331 = vmul.f32 %v329, %v45
    %s332 = sld [smem:[#allocation2 + $0x201]]
    %v333 = vstv %s332
    %v334 = vmul.f32 %v333, %v49
    %v335 = vmul.f32 %v333, %v45
    %v336 = vmul.f32 %v333, %v50
    %v340 = vrot.slane %v334, 1
    %v341 = vrot.slane %v335, 1
    %v342 = vsel %vm63, %v340, %v341
    %v343 = vrot.slane %v336, 1
    %v344 = vsel %vm63, %v341, %v343
    %v347 = vadd.f32 %v330, %v342
    %v348 = vadd.f32 %v331, %v344
    %s349 = sld [smem:[#allocation2 + $0x202]]
    %v350 = vstv %s349
    %v351 = vmul.f32 %v350, %v49
    %v352 = vmul.f32 %v350, %v45
    %v353 = vmul.f32 %v350, %v50
    %v357 = vrot.slane %v351, 2
    %v358 = vrot.slane %v352, 2
    %v359 = vsel %vm81, %v357, %v358
    %v360 = vrot.slane %v353, 2
    %v361 = vsel %vm81, %v358, %v360
    %v364 = vadd.f32 %v347, %v359
    %v365 = vadd.f32 %v348, %v361
    %v366 = vmax.f32 %v364, 0.0
    %v367 = vmax.f32 %v365, 0.0
    %v369 = vrot.slane %v366, 1
    %v371 = vmax.f32 %v366, %v369
    %v372 = vrot.slane %v366, 2
    %v374 = vmax.f32 %v371, %v372
    %v376 = vrot.slane %v367, 2
    %v378 = vmax.f32 %v371, %v376
    %v379 = vrot.slane %v367, 1
    %v381 = vmax.f32 %v367, %v379
    %v382 = vmax.f32 %v381, %v376
    %v384 = vrot.slane %v374, 2
    %v387 = vrot.slane %v378, 4
    %v390 = vrot.slane %v382, 6
    %v392 = vsel %vm42, %v374, %v384
    %v393 = vsel %vm118, %v392, %v387
    %v394 = vsel %vm120, %v393, %v390
    %v395 = vsel %vm122, %v394, %v382
    %s396 = sld [smem:[#allocation2 + $0x280]]
    %v397 = vstv %s396
    %v398 = vmul.f32 %v397, %v49
    %v399 = vmul.f32 %v397, %v45
    %s400 = sld [smem:[#allocation2 + $0x281]]
    %v401 = vstv %s400
    %v402 = vmul.f32 %v401, %v49
    %v403 = vmul.f32 %v401, %v45
    %v404 = vmul.f32 %v401, %v50
    %v408 = vrot.slane %v402, 1
    %v409 = vrot.slane %v403, 1
    %v410 = vsel %vm63, %v408, %v409
    %v411 = vrot.slane %v404, 1
    %v412 = vsel %vm63, %v409, %v411
    %v415 = vadd.f32 %v398, %v410
    %v416 = vadd.f32 %v399, %v412
    %s417 = sld [smem:[#allocation2 + $0x282]]
    %v418 = vstv %s417
    %v419 = vmul.f32 %v418, %v49
    %v420 = vmul.f32 %v418, %v45
    %v421 = vmul.f32 %v418, %v50
    %v425 = vrot.slane %v419, 2
    %v426 = vrot.slane %v420, 2
    %v427 = vsel %vm81, %v425, %v426
    %v428 = vrot.slane %v421, 2
    %v429 = vsel %vm81, %v426, %v428
    %v432 = vadd.f32 %v415, %v427
    %v433 = vadd.f32 %v416, %v429
    %v434 = vmax.f32 %v432, 0.0
    %v435 = vmax.f32 %v433, 0.0
    %v437 = vrot.slane %v434, 1
    %v439 = vmax.f32 %v434, %v437
    %v440 = vrot.slane %v434, 2
    %v442 = vmax.f32 %v439, %v440
    %v444 = vrot.slane %v435, 2
    %v446 = vmax.f32 %v439, %v444
    %v447 = vrot.slane %v435, 1
    %v449 = vmax.f32 %v435, %v447
    %v450 = vmax.f32 %v449, %v444
    %v452 = vrot.slane %v442, 2
    %v455 = vrot.slane %v446, 4
    %v458 = vrot.slane %v450, 6
    %v460 = vsel %vm42, %v442, %v452
    %v461 = vsel %vm118, %v460, %v455
    %v462 = vsel %vm120, %v461, %v458
    %v463 = vsel %vm122, %v462, %v450
    %s464 = sld [smem:[#allocation2 + $0x300]]
    %v465 = vstv %s464
    %v466 = vmul.f32 %v465, %v49
    %v467 = vmul.f32 %v465, %v45
    %s468 = sld [smem:[#allocation2 + $0x301]]
    %v469 = vstv %s468
    %v470 = vmul.f32 %v469, %v49
    %v471 = vmul.f32 %v469, %v45
    %v472 = vmul.f32 %v469, %v50
    %v476 = vrot.slane %v470, 1
    %v477 = vrot.slane %v471, 1
    %v478 = vsel %vm63, %v476, %v477
    %v479 = vrot.slane %v472, 1
    %v480 = vsel %vm63, %v477, %v479
    %v483 = vadd.f32 %v466, %v478
    %v484 = vadd.f32 %v467, %v480
    %s485 = sld [smem:[#allocation2 + $0x302]]
    %v486 = vstv %s485
    %v487 = vmul.f32 %v486, %v49
    %v488 = vmul.f32 %v486, %v45
    %v489 = vmul.f32 %v486, %v50
    %v493 = vrot.slane %v487, 2
    %v494 = vrot.slane %v488, 2
    %v495 = vsel %vm81, %v493, %v494
    %v496 = vrot.slane %v489, 2
    %v497 = vsel %vm81, %v494, %v496
    %v500 = vadd.f32 %v483, %v495
    %v501 = vadd.f32 %v484, %v497
    %v502 = vmax.f32 %v500, 0.0
    %v503 = vmax.f32 %v501, 0.0
    %v505 = vrot.slane %v502, 1
    %v507 = vmax.f32 %v502, %v505
    %v508 = vrot.slane %v502, 2
    %v510 = vmax.f32 %v507, %v508
    %v512 = vrot.slane %v503, 2
    %v514 = vmax.f32 %v507, %v512
    %v515 = vrot.slane %v503, 1
    %v517 = vmax.f32 %v503, %v515
    %v518 = vmax.f32 %v517, %v512
    %v520 = vrot.slane %v510, 2
    %v523 = vrot.slane %v514, 4
    %v526 = vrot.slane %v518, 6
    %v528 = vsel %vm42, %v510, %v520
    %v529 = vsel %vm118, %v528, %v523
    %v530 = vsel %vm120, %v529, %v526
    %v531 = vsel %vm122, %v530, %v518
    %s532 = sld [smem:[#allocation2 + $0x380]]
    %v533 = vstv %s532
    %v534 = vmul.f32 %v533, %v49
    %v535 = vmul.f32 %v533, %v45
    %s536 = sld [smem:[#allocation2 + $0x381]]
    %v537 = vstv %s536
    %v538 = vmul.f32 %v537, %v49
    %v539 = vmul.f32 %v537, %v45
    %v540 = vmul.f32 %v537, %v50
    %v544 = vrot.slane %v538, 1
    %v545 = vrot.slane %v539, 1
    %v546 = vsel %vm63, %v544, %v545
    %v547 = vrot.slane %v540, 1
    %v548 = vsel %vm63, %v545, %v547
    %v551 = vadd.f32 %v534, %v546
    %v552 = vadd.f32 %v535, %v548
    %s553 = sld [smem:[#allocation2 + $0x382]]
    %v554 = vstv %s553
    %v555 = vmul.f32 %v554, %v49
    %v556 = vmul.f32 %v554, %v45
    %v557 = vmul.f32 %v554, %v50
    %v561 = vrot.slane %v555, 2
    %v562 = vrot.slane %v556, 2
    %v563 = vsel %vm81, %v561, %v562
    %v564 = vrot.slane %v557, 2
    %v565 = vsel %vm81, %v562, %v564
    %v568 = vadd.f32 %v551, %v563
    %v569 = vadd.f32 %v552, %v565
    %v570 = vmax.f32 %v568, 0.0
    %v571 = vmax.f32 %v569, 0.0
    %v573 = vrot.slane %v570, 1
    %v575 = vmax.f32 %v570, %v573
    %v576 = vrot.slane %v570, 2
    %v578 = vmax.f32 %v575, %v576
    %v580 = vrot.slane %v571, 2
    %v582 = vmax.f32 %v575, %v580
    %v583 = vrot.slane %v571, 1
    %v585 = vmax.f32 %v571, %v583
    %v586 = vmax.f32 %v585, %v580
    %v588 = vrot.slane %v578, 2
    %v591 = vrot.slane %v582, 4
    %v594 = vrot.slane %v586, 6
    %v596 = vsel %vm42, %v578, %v588
    %v597 = vsel %vm118, %v596, %v591
    %v598 = vsel %vm120, %v597, %v594
    %v599 = vsel %vm122, %v598, %v586
    %v608 = vrot.slane %v123, 1
    %v609 = vrot.slane %v191, 1
    %v610 = vrot.slane %v259, 1
    %v611 = vrot.slane %v327, 1
    %v612 = vrot.slane %v395, 1
    %v613 = vrot.slane %v463, 1
    %v614 = vrot.slane %v531, 1
    %v615 = vrot.slane %v599, 1
    %v624 = vmax.f32 %v123, %v608
    %v625 = vmax.f32 %v191, %v609
    %v626 = vmax.f32 %v259, %v610
    %v627 = vmax.f32 %v327, %v611
    %v628 = vmax.f32 %v395, %v612
    %v629 = vmax.f32 %v463, %v613
    %v630 = vmax.f32 %v531, %v614
    %v631 = vmax.f32 %v599, %v615
    %v632 = vrot.slane %v123, 2
    %v633 = vrot.slane %v191, 2
    %v634 = vrot.slane %v259, 2
    %v635 = vrot.slane %v327, 2
    %v636 = vrot.slane %v395, 2
    %v637 = vrot.slane %v463, 2
    %v638 = vrot.slane %v531, 2
    %v639 = vrot.slane %v599, 2
    %v648 = vmax.f32 %v624, %v632
    %v649 = vmax.f32 %v625, %v633
    %v650 = vmax.f32 %v626, %v634
    %v651 = vmax.f32 %v627, %v635
    %v652 = vmax.f32 %v628, %v636
    %v653 = vmax.f32 %v629, %v637
    %v654 = vmax.f32 %v630, %v638
    %v655 = vmax.f32 %v631, %v639
    %v656 = vrot.slane %v123, 3
    %v657 = vrot.slane %v191, 3
    %v658 = vrot.slane %v259, 3
    %v659 = vrot.slane %v327, 3
    %v660 = vrot.slane %v395, 3
    %v661 = vrot.slane %v463, 3
    %v662 = vrot.slane %v531, 3
    %v663 = vrot.slane %v599, 3
    %v672 = vmax.f32 %v648, %v656
    %v673 = vmax.f32 %v649, %v657
    %v674 = vmax.f32 %v650, %v658
    %v675 = vmax.f32 %v651, %v659
    %v676 = vmax.f32 %v652, %v660
    %v677 = vmax.f32 %v653, %v661
    %v678 = vmax.f32 %v654, %v662
    %v679 = vmax.f32 %v655, %v663
    %v680 = vrot.slane %v123, 4
    %v681 = vrot.slane %v191, 4
    %v682 = vrot.slane %v259, 4
    %v683 = vrot.slane %v327, 4
    %v684 = vrot.slane %v395, 4
    %v685 = vrot.slane %v463, 4
    %v686 = vrot.slane %v531, 4
    %v687 = vrot.slane %v599, 4
    %v696 = vmax.f32 %v672, %v680
    %v697 = vmax.f32 %v673, %v681
    %v698 = vmax.f32 %v674, %v682
    %v699 = vmax.f32 %v675, %v683
    %v700 = vmax.f32 %v676, %v684
    %v701 = vmax.f32 %v677, %v685
    %v702 = vmax.f32 %v678, %v686
    %v703 = vmax.f32 %v679, %v687
    %v704 = vlaneseq
    %v705 = vshrl.u32 %v704, 7
    %v706 = vsub.s32 0, %v705
    %v707 = vrot.slane %v696, %v706
    %v708 = vlaneseq
    %v709 = vshrl.u32 %v708, 7
    %v710 = vsub.s32 0, %v709
    %v711 = vrot.slane %v697, %v710
    %v712 = vlaneseq
    %v713 = vshrl.u32 %v712, 7
    %v714 = vsub.s32 0, %v713
    %v715 = vrot.slane %v698, %v714
    %v716 = vlaneseq
    %v717 = vshrl.u32 %v716, 7
    %v718 = vsub.s32 0, %v717
    %v719 = vrot.slane %v699, %v718
    %v720 = vlaneseq
    %v721 = vshrl.u32 %v720, 7
    %v722 = vsub.s32 0, %v721
    %v723 = vrot.slane %v700, %v722
    %v724 = vlaneseq
    %v725 = vshrl.u32 %v724, 7
    %v726 = vsub.s32 0, %v725
    %v727 = vrot.slane %v701, %v726
    %v728 = vlaneseq
    %v729 = vshrl.u32 %v728, 7
    %v730 = vsub.s32 0, %v729
    %v731 = vrot.slane %v702, %v730
    %v732 = vlaneseq
    %v733 = vshrl.u32 %v732, 7
    %v734 = vsub.s32 0, %v733
    %v735 = vrot.slane %v703, %v734
    %v736 = vsub.f32 %v123, %v707
    %v737 = vsub.f32 %v191, %v711
    %v738 = vsub.f32 %v259, %v715
    %v739 = vsub.f32 %v327, %v719
    %v740 = vsub.f32 %v395, %v723
    %v741 = vsub.f32 %v463, %v727
    %v742 = vsub.f32 %v531, %v731
    %v743 = vsub.f32 %v599, %v735
    %v744 = vmul.f32 %v736, 1.442695
    %v745 = vpow.pop %v744
    %v746 = vmul.f32 %v737, 1.442695
    %v747 = vpow.pop %v746
    %v748 = vmul.f32 %v738, 1.442695
    %v749 = vpow.pop %v748
    %v750 = vmul.f32 %v739, 1.442695
    %v751 = vpow.pop %v750
    %v752 = vmul.f32 %v740, 1.442695
    %v753 = vpow.pop %v752
    %v754 = vmul.f32 %v741, 1.442695
    %v755 = vpow.pop %v754
    %v756 = vmul.f32 %v742, 1.442695
    %v757 = vpow.pop %v756
    %v758 = vmul.f32 %v743, 1.442695
    %v759 = vpow.pop %v758
    %v768 = vrot.slane %v745, 1
    %v769 = vrot.slane %v747, 1
    %v770 = vrot.slane %v749, 1
    %v771 = vrot.slane %v751, 1
    %v772 = vrot.slane %v753, 1
    %v773 = vrot.slane %v755, 1
    %v774 = vrot.slane %v757, 1
    %v775 = vrot.slane %v759, 1
    %v784 = vadd.f32 %v745, %v768
    %v785 = vadd.f32 %v747, %v769
    %v786 = vadd.f32 %v749, %v770
    %v787 = vadd.f32 %v751, %v771
    %v788 = vadd.f32 %v753, %v772
    %v789 = vadd.f32 %v755, %v773
    %v790 = vadd.f32 %v757, %v774
    %v791 = vadd.f32 %v759, %v775
    %v792 = vrot.slane %v745, 2
    %v793 = vrot.slane %v747, 2
    %v794 = vrot.slane %v749, 2
    %v795 = vrot.slane %v751, 2
    %v796 = vrot.slane %v753, 2
    %v797 = vrot.slane %v755, 2
    %v798 = vrot.slane %v757, 2
    %v799 = vrot.slane %v759, 2
    %v808 = vadd.f32 %v784, %v792
    %v809 = vadd.f32 %v785, %v793
    %v810 = vadd.f32 %v786, %v794
    %v811 = vadd.f32 %v787, %v795
    %v812 = vadd.f32 %v788, %v796
    %v813 = vadd.f32 %v789, %v797
    %v814 = vadd.f32 %v790, %v798
    %v815 = vadd.f32 %v791, %v799
    %v816 = vrot.slane %v745, 3
    %v817 = vrot.slane %v747, 3
    %v818 = vrot.slane %v749, 3
    %v819 = vrot.slane %v751, 3
    %v820 = vrot.slane %v753, 3
    %v821 = vrot.slane %v755, 3
    %v822 = vrot.slane %v757, 3
    %v823 = vrot.slane %v759, 3
    %v832 = vadd.f32 %v808, %v816
    %v833 = vadd.f32 %v809, %v817
    %v834 = vadd.f32 %v810, %v818
    %v835 = vadd.f32 %v811, %v819
    %v836 = vadd.f32 %v812, %v820
    %v837 = vadd.f32 %v813, %v821
    %v838 = vadd.f32 %v814, %v822
    %v839 = vadd.f32 %v815, %v823
    %v840 = vrot.slane %v745, 4
    %v841 = vrot.slane %v747, 4
    %v842 = vrot.slane %v749, 4
    %v843 = vrot.slane %v751, 4
    %v844 = vrot.slane %v753, 4
    %v845 = vrot.slane %v755, 4
    %v846 = vrot.slane %v757, 4
    %v847 = vrot.slane %v759, 4
    %v856 = vadd.f32 %v832, %v840
    %v857 = vadd.f32 %v833, %v841
    %v858 = vadd.f32 %v834, %v842
    %v859 = vadd.f32 %v835, %v843
    %v860 = vadd.f32 %v836, %v844
    %v861 = vadd.f32 %v837, %v845
    %v862 = vadd.f32 %v838, %v846
    %v863 = vadd.f32 %v839, %v847
    %v864 = vrcp.pop %v856
    %v865 = vrcp.pop %v857
    %v866 = vrcp.pop %v858
    %v867 = vrcp.pop %v859
    %v868 = vrcp.pop %v860
    %v869 = vrcp.pop %v861
    %v870 = vrcp.pop %v862
    %v871 = vrcp.pop %v863
    %v872 = vmul.f32 %v856, %v864
    %v873 = vmul.f32 %v857, %v865
    %v874 = vmul.f32 %v858, %v866
    %v875 = vmul.f32 %v859, %v867
    %v876 = vmul.f32 %v860, %v868
    %v877 = vmul.f32 %v861, %v869
    %v878 = vmul.f32 %v862, %v870
    %v879 = vmul.f32 %v863, %v871
    %v880 = vsub.f32 2.0, %v872
    %v881 = vsub.f32 2.0, %v873
    %v882 = vsub.f32 2.0, %v874
    %v883 = vsub.f32 2.0, %v875
    %v884 = vsub.f32 2.0, %v876
    %v885 = vsub.f32 2.0, %v877
    %v886 = vsub.f32 2.0, %v878
    %v887 = vsub.f32 2.0, %v879
    %v888 = vmul.f32 %v864, %v880
    %v889 = vmul.f32 %v865, %v881
    %v890 = vmul.f32 %v866, %v882
    %v891 = vmul.f32 %v867, %v883
    %v892 = vmul.f32 %v868, %v884
    %v893 = vmul.f32 %v869, %v885
    %v894 = vmul.f32 %v870, %v886
    %v895 = vmul.f32 %v871, %v887
    %v896 = vlaneseq
    %v897 = vshrl.u32 %v896, 7
    %v898 = vsub.s32 0, %v897
    %v899 = vrot.slane %v888, %v898
    %v900 = vlaneseq
    %v901 = vshrl.u32 %v900, 7
    %v902 = vsub.s32 0, %v901
    %v903 = vrot.slane %v889, %v902
    %v904 = vlaneseq
    %v905 = vshrl.u32 %v904, 7
    %v906 = vsub.s32 0, %v905
    %v907 = vrot.slane %v890, %v906
    %v908 = vlaneseq
    %v909 = vshrl.u32 %v908, 7
    %v910 = vsub.s32 0, %v909
    %v911 = vrot.slane %v891, %v910
    %v912 = vlaneseq
    %v913 = vshrl.u32 %v912, 7
    %v914 = vsub.s32 0, %v913
    %v915 = vrot.slane %v892, %v914
    %v916 = vlaneseq
    %v917 = vshrl.u32 %v916, 7
    %v918 = vsub.s32 0, %v917
    %v919 = vrot.slane %v893, %v918
    %v920 = vlaneseq
    %v921 = vshrl.u32 %v920, 7
    %v922 = vsub.s32 0, %v921
    %v923 = vrot.slane %v894, %v922
    %v924 = vlaneseq
    %v925 = vshrl.u32 %v924, 7
    %v926 = vsub.s32 0, %v925
    %v927 = vrot.slane %v895, %v926
    %v928 = vmul.f32 %v745, %v899
    %v929 = vmul.f32 %v747, %v903
    %v930 = vmul.f32 %v749, %v907
    %v931 = vmul.f32 %v751, %v911
    %v932 = vmul.f32 %v753, %v915
    %v933 = vmul.f32 %v755, %v919
    %v934 = vmul.f32 %v757, %v923
    %v935 = vmul.f32 %v759, %v927
    %936 = vst [vmem:[%s2] sm:$0x1f] %v928
    %937 = vst [vmem:[%s2 + $0x8] sm:$0x1f] %v929
    %938 = vst [vmem:[%s2 + $0x10] sm:$0x1f] %v930
    %939 = vst [vmem:[%s2 + $0x18] sm:$0x1f] %v931
    %940 = vst [vmem:[%s2 + $0x20] sm:$0x1f] %v932
    %941 = vst [vmem:[%s2 + $0x28] sm:$0x1f] %v933
    %942 = vst [vmem:[%s2 + $0x30] sm:$0x1f] %v934
    %943 = vst [vmem:[%s2 + $0x38] sm:$0x1f] %v935
    // Predicated region
    $region18: #{tpu_custom_call.1} parent=1 // pred_check
      _
    $region19: #{tpu_custom_call.1} parent=1 // pred_check_branch
      %945 = sbr.rel (0) target = $region21
    $region20: #{tpu_custom_call.1} parent=1 // pred_region
      _
    $region21: #{tpu_custom_call.1} parent=1 // pred_fallthru
      _
    // Predicated region
    $region22: #{tpu_custom_call.1} parent=1 // pred_check
      _
    $region23: #{tpu_custom_call.1} parent=1 // pred_check_branch
      %947 = sbr.rel (0) target = $region25
    $region24: #{tpu_custom_call.1} parent=1 // pred_region
      _
    $region25: #{tpu_custom_call.1} parent=1 // pred_fallthru
      _
    %948 = vsyncpa [#allocation3], 1
    %949 = vsyncpa [#allocation4], 1

</llo_original>
